<compile_context>
chip_gen: v7x
topology: tpu7x:2x2x1
jax: 0.10.0
libtpu: 0.0.40
codegen_flags: <defaults>
</compile_context>

<pallas_src>
import functools

import jax
import jax.numpy as jnp
from jax.experimental import pallas as pl
from jax.experimental.pallas import tpu as pltpu

# Logical (PyTorch) dims.
D_IN, H1, H2, H3, D_OUT = 350, 150, 50, 10, 3
# Lane-padded hidden dims (multiples of 128).  Input K and output N stay logical.
H1_P, H2_P, H3_P = 256, 128, 128


def _cdiv(a, b):
    return -(-a // b)


def _round_up(n, m):
    return _cdiv(n, m) * m


def _sigmoid_f32(h):
    # sigmoid(h) = 0.5 * tanh(0.5 * h) + 0.5  -> single EUP op, no overflow.
    return 0.5 * jnp.tanh(0.5 * h) + 0.5


def mlp_kernel(x_ref, w1_ref, b1_ref, w2_ref, b2_ref, w3_ref, b3_ref,
               w4_ref, b4_ref, o_ref):
    # x_ref: [TB, 350] f32 batch tile.  Weights bf16, biases f32 [1, out].
    # All matmuls accumulate in f32 on the MXU; activations stay f32.
    x = x_ref[...].astype(jnp.bfloat16)

    h = jnp.dot(x, w1_ref[...], preferred_element_type=jnp.float32) + b1_ref[...]
    h = _sigmoid_f32(h)

    h = jnp.dot(h.astype(jnp.bfloat16), w2_ref[...],
                preferred_element_type=jnp.float32) + b2_ref[...]
    h = _sigmoid_f32(h)

    h = jnp.dot(h.astype(jnp.bfloat16), w3_ref[...],
                preferred_element_type=jnp.float32) + b3_ref[...]
    h = _sigmoid_f32(h)

    out = jnp.dot(h.astype(jnp.bfloat16), w4_ref[...],
                  preferred_element_type=jnp.float32) + b4_ref[...]
    o_ref[...] = out.astype(o_ref.dtype)           # [TB, 3] compact writeback


def pad_params_for_kernel(params):
    """Cast weights to bf16, zero-pad hidden dims to 128-lane multiples.

    Layer-1 K stays 350 (matches the unpadded X block) and layer-4 N stays 3
    (compact output).  Zero-padded rows/cols guarantee padded hidden lanes
    never affect real output lanes.  Biases stay f32.
    """
    w1, b1, w2, b2, w3, b3, w4, b4 = params
    shapes = [(D_IN, H1_P), (H1_P, H2_P), (H2_P, H3_P), (H3_P, D_OUT)]
    padded = []
    for (w, b), (ip, op) in zip(((w1, b1), (w2, b2), (w3, b3), (w4, b4)), shapes):
        wp = jnp.zeros((ip, op), jnp.bfloat16).at[:w.shape[0], :w.shape[1]].set(
            w.astype(jnp.bfloat16))
        bp = jnp.zeros((1, op), jnp.float32).at[:, :b.shape[1]].set(b)
        padded += [wp, bp]
    return padded


def _tiling(B, tb):
    """Batch tile size / count.

    * >=2 grid steps once B >= 512 so the "parallel" axis shards across v7x's
      two TensorCores (no effect on 1-TC v5e/v6e).
    * tile rows a multiple of 16 (bf16 sublane packing); padding <= 15 rows.
    * tiny batches: never exceed round_up(B, 8) rows.
    """
    n = max(_cdiv(B, tb), min(2, _cdiv(B, 256)))
    tile_b = _round_up(_cdiv(B, n), 16)
    tile_b = min(tile_b, _round_up(B, 8))
    return tile_b, _cdiv(B, tile_b)


@functools.partial(jax.jit, static_argnames=("tb",))
def xy_net_forward(x, padded_params, tb=2048):
    """x: [B, 350] float32 -> [B, 3] float32 (bf16 MXU inputs, f32 accumulation)."""
    B = x.shape[0]
    w1, b1, w2, b2, w3, b3, w4, b4 = padded_params
    tile_b, n_tiles = _tiling(B, tb)

    # Constant index map: weights/biases fetched once, stay VMEM-resident.
    const_spec = lambda a: pl.BlockSpec(a.shape, lambda i: (0,) * a.ndim)

    return pl.pallas_call(
        mlp_kernel,
        out_shape=jax.ShapeDtypeStruct((B, D_OUT), jnp.float32),
        grid=(n_tiles,),
        in_specs=[
            # X tiled on batch; last block dim 350 == full array dim (legal).
            pl.BlockSpec((tile_b, D_IN), lambda i: (i, 0)),
            const_spec(w1), const_spec(b1),
            const_spec(w2), const_spec(b2),
            const_spec(w3), const_spec(b3),
            const_spec(w4), const_spec(b4),
        ],
        # Compact (tile_b, 3) output block; last dim == full array dim.
        out_specs=pl.BlockSpec((tile_b, D_OUT), lambda i: (i, 0)),
        compiler_params=pltpu.CompilerParams(
            dimension_semantics=("parallel",),
            vmem_limit_bytes=64 * 1024 * 1024,
        ),
    )(x, w1, b1, w2, b2, w3, b3, w4, b4)


def init_params(key):
    """Deterministic PyTorch-style (uniform +/- 1/sqrt(fan_in)) init, f32."""
    dims = [(D_IN, H1), (H1, H2), (H2, H3), (H3, D_OUT)]
    params = []
    for i, (fan_in, fan_out) in enumerate(dims):
        kw, kb = jax.random.split(jax.random.fold_in(key, i))
        bound = 1.0 / (fan_in ** 0.5)
        # Stored as [in, out] so the kernel computes x @ W (PyTorch stores [out, in]).
        w = jax.random.uniform(kw, (fan_in, fan_out), jnp.float32, -bound, bound)
        b = jax.random.uniform(kb, (1, fan_out), jnp.float32, -bound, bound)
        params += [w, b]
    return params


def reference_forward(x, params):
    """Pure f32 reference matching the PyTorch module semantics."""
    w1, b1, w2, b2, w3, b3, w4, b4 = params
    h = jax.nn.sigmoid(x @ w1 + b1)
    h = jax.nn.sigmoid(h @ w2 + b2)
    h = jax.nn.sigmoid(h @ w3 + b3)
    return h @ w4 + b4


if __name__ == "__main__":
    key = jax.random.PRNGKey(0)
    k_x, k_p = jax.random.split(key)

    B = 8
    x = jax.random.normal(k_x, (B, D_IN), dtype=jnp.float32)
    params = init_params(k_p)
    padded_params = pad_params_for_kernel(params)

    out = xy_net_forward(x, padded_params)
    out = jax.block_until_ready(out)

    ref = reference_forward(x, params)
    assert out.shape == (B, D_OUT)
    # Tolerance accounts for bf16 matmul inputs (f32 accumulation keeps the
    # error well inside this bound).
    assert jnp.allclose(out, ref, atol=2e-2, rtol=2e-2), (
        f"max abs err = {jnp.max(jnp.abs(out - ref))}")

    print("KERNEL_OK")
</pallas_src>

<mosaic_0001>
module attributes {stable_mosaic.version = 11 : i64} {
  func.func @mlp_kernel(%arg0: i32, %arg1: memref<8x350xf32, #tpu.memory_space<vmem>>, %arg2: memref<350x256xbf16, #tpu.memory_space<vmem>>, %arg3: memref<1x256xf32, #tpu.memory_space<vmem>>, %arg4: memref<256x128xbf16, #tpu.memory_space<vmem>>, %arg5: memref<1x128xf32, #tpu.memory_space<vmem>>, %arg6: memref<128x128xbf16, #tpu.memory_space<vmem>>, %arg7: memref<1x128xf32, #tpu.memory_space<vmem>>, %arg8: memref<128x3xbf16, #tpu.memory_space<vmem>>, %arg9: memref<1x3xf32, #tpu.memory_space<vmem>>, %arg10: memref<8x3xf32, #tpu.memory_space<vmem>>) attributes {dimension_semantics = [#tpu.dimension_semantics<parallel>], iteration_bounds = array<i64: 1>, scalar_prefetch = 0 : i64, scratch_operands = 0 : i64, tpu.core_type = #tpu.core_type<tc>, window_params = [{transform_indices = @transform_0, window_bounds = array<i64: 8, 350>}, {pipeline_mode = #tpu.pipeline_mode<synchronous>, transform_indices = @transform_1, window_bounds = array<i64: 350, 256>}, {pipeline_mode = #tpu.pipeline_mode<synchronous>, transform_indices = @transform_2, window_bounds = array<i64: 1, 256>}, {pipeline_mode = #tpu.pipeline_mode<synchronous>, transform_indices = @transform_3, window_bounds = array<i64: 256, 128>}, {pipeline_mode = #tpu.pipeline_mode<synchronous>, transform_indices = @transform_4, window_bounds = array<i64: 1, 128>}, {pipeline_mode = #tpu.pipeline_mode<synchronous>, transform_indices = @transform_5, window_bounds = array<i64: 128, 128>}, {pipeline_mode = #tpu.pipeline_mode<synchronous>, transform_indices = @transform_6, window_bounds = array<i64: 1, 128>}, {pipeline_mode = #tpu.pipeline_mode<synchronous>, transform_indices = @transform_7, window_bounds = array<i64: 128, 3>}, {pipeline_mode = #tpu.pipeline_mode<synchronous>, transform_indices = @transform_8, window_bounds = array<i64: 1, 3>}, {transform_indices = @transform_9, window_bounds = array<i64: 8, 3>}]} {
    %c0 = arith.constant 0 : index
    %c0_0 = arith.constant 0 : index
    %0 = vector.load %arg1[%c0, %c0_0] : memref<8x350xf32, #tpu.memory_space<vmem>>, vector<8x350xf32>
    %1 = arith.truncf %0 : vector<8x350xf32> to vector<8x350xbf16>
    %c0_1 = arith.constant 0 : index
    %c0_2 = arith.constant 0 : index
    %2 = vector.load %arg2[%c0_1, %c0_2] : memref<350x256xbf16, #tpu.memory_space<vmem>>, vector<350x256xbf16>
    %cst = arith.constant dense<0.000000e+00> : vector<8x256xf32>
    %3 = tpu.matmul %1, %2, %cst {dimension_numbers = #tpu.dot_dimension_numbers<[1], [0], [0], [1], [0, 0, 1, 1], [], []>} : vector<8x350xbf16>, vector<350x256xbf16>, vector<8x256xf32> -> vector<8x256xf32>
    %c0_3 = arith.constant 0 : index
    %c0_4 = arith.constant 0 : index
    %4 = vector.load %arg3[%c0_3, %c0_4] : memref<1x256xf32, #tpu.memory_space<vmem>>, vector<1x256xf32>
    %5 = vector.broadcast %4 : vector<1x256xf32> to vector<8x256xf32>
    %6 = arith.addf %3, %5 : vector<8x256xf32>
    %cst_5 = arith.constant 5.000000e-01 : f32
    %7 = vector.broadcast %cst_5 : f32 to vector<8x256xf32>
    %8 = arith.mulf %7, %6 : vector<8x256xf32>
    %9 = math.tanh %8 : vector<8x256xf32>
    %cst_6 = arith.constant 5.000000e-01 : f32
    %10 = vector.broadcast %cst_6 : f32 to vector<8x256xf32>
    %11 = arith.mulf %10, %9 : vector<8x256xf32>
    %cst_7 = arith.constant 5.000000e-01 : f32
    %12 = vector.broadcast %cst_7 : f32 to vector<8x256xf32>
    %13 = arith.addf %11, %12 : vector<8x256xf32>
    %14 = arith.truncf %13 : vector<8x256xf32> to vector<8x256xbf16>
    %c0_8 = arith.constant 0 : index
    %c0_9 = arith.constant 0 : index
    %15 = vector.load %arg4[%c0_8, %c0_9] : memref<256x128xbf16, #tpu.memory_space<vmem>>, vector<256x128xbf16>
    %cst_10 = arith.constant dense<0.000000e+00> : vector<8x128xf32>
    %16 = tpu.matmul %14, %15, %cst_10 {dimension_numbers = #tpu.dot_dimension_numbers<[1], [0], [0], [1], [0, 0, 1, 1], [], []>} : vector<8x256xbf16>, vector<256x128xbf16>, vector<8x128xf32> -> vector<8x128xf32>
    %c0_11 = arith.constant 0 : index
    %c0_12 = arith.constant 0 : index
    %17 = vector.load %arg5[%c0_11, %c0_12] : memref<1x128xf32, #tpu.memory_space<vmem>>, vector<1x128xf32>
    %18 = vector.broadcast %17 : vector<1x128xf32> to vector<8x128xf32>
    %19 = arith.addf %16, %18 : vector<8x128xf32>
    %cst_13 = arith.constant 5.000000e-01 : f32
    %20 = vector.broadcast %cst_13 : f32 to vector<8x128xf32>
    %21 = arith.mulf %20, %19 : vector<8x128xf32>
    %22 = math.tanh %21 : vector<8x128xf32>
    %cst_14 = arith.constant 5.000000e-01 : f32
    %23 = vector.broadcast %cst_14 : f32 to vector<8x128xf32>
    %24 = arith.mulf %23, %22 : vector<8x128xf32>
    %cst_15 = arith.constant 5.000000e-01 : f32
    %25 = vector.broadcast %cst_15 : f32 to vector<8x128xf32>
    %26 = arith.addf %24, %25 : vector<8x128xf32>
    %27 = arith.truncf %26 : vector<8x128xf32> to vector<8x128xbf16>
    %c0_16 = arith.constant 0 : index
    %c0_17 = arith.constant 0 : index
    %28 = vector.load %arg6[%c0_16, %c0_17] : memref<128x128xbf16, #tpu.memory_space<vmem>>, vector<128x128xbf16>
    %cst_18 = arith.constant dense<0.000000e+00> : vector<8x128xf32>
    %29 = tpu.matmul %27, %28, %cst_18 {dimension_numbers = #tpu.dot_dimension_numbers<[1], [0], [0], [1], [0, 0, 1, 1], [], []>} : vector<8x128xbf16>, vector<128x128xbf16>, vector<8x128xf32> -> vector<8x128xf32>
    %c0_19 = arith.constant 0 : index
    %c0_20 = arith.constant 0 : index
    %30 = vector.load %arg7[%c0_19, %c0_20] : memref<1x128xf32, #tpu.memory_space<vmem>>, vector<1x128xf32>
    %31 = vector.broadcast %30 : vector<1x128xf32> to vector<8x128xf32>
    %32 = arith.addf %29, %31 : vector<8x128xf32>
    %cst_21 = arith.constant 5.000000e-01 : f32
    %33 = vector.broadcast %cst_21 : f32 to vector<8x128xf32>
    %34 = arith.mulf %33, %32 : vector<8x128xf32>
    %35 = math.tanh %34 : vector<8x128xf32>
    %cst_22 = arith.constant 5.000000e-01 : f32
    %36 = vector.broadcast %cst_22 : f32 to vector<8x128xf32>
    %37 = arith.mulf %36, %35 : vector<8x128xf32>
    %cst_23 = arith.constant 5.000000e-01 : f32
    %38 = vector.broadcast %cst_23 : f32 to vector<8x128xf32>
    %39 = arith.addf %37, %38 : vector<8x128xf32>
    %40 = arith.truncf %39 : vector<8x128xf32> to vector<8x128xbf16>
    %c0_24 = arith.constant 0 : index
    %c0_25 = arith.constant 0 : index
    %41 = vector.load %arg8[%c0_24, %c0_25] : memref<128x3xbf16, #tpu.memory_space<vmem>>, vector<128x3xbf16>
    %cst_26 = arith.constant dense<0.000000e+00> : vector<8x3xf32>
    %42 = tpu.matmul %40, %41, %cst_26 {dimension_numbers = #tpu.dot_dimension_numbers<[1], [0], [0], [1], [0, 0, 1, 1], [], []>} : vector<8x128xbf16>, vector<128x3xbf16>, vector<8x3xf32> -> vector<8x3xf32>
    %c0_27 = arith.constant 0 : index
    %c0_28 = arith.constant 0 : index
    %43 = vector.load %arg9[%c0_27, %c0_28] : memref<1x3xf32, #tpu.memory_space<vmem>>, vector<1x3xf32>
    %44 = vector.broadcast %43 : vector<1x3xf32> to vector<8x3xf32>
    %45 = arith.addf %42, %44 : vector<8x3xf32>
    %c0_29 = arith.constant 0 : index
    %c0_30 = arith.constant 0 : index
    %46 = vector.load %arg10[%c0_29, %c0_30] : memref<8x3xf32, #tpu.memory_space<vmem>>, vector<8x3xf32>
    tpu.vector_store %arg10[%c0_29, %c0_30], %45 {strides = array<i32>} : memref<8x3xf32, #tpu.memory_space<vmem>>, vector<8x3xf32>,
    return
  }
  func.func @transform_0(%arg0: i32) -> (i32, i32) {
    %c0_i32 = arith.constant 0 : i32
    %c0_i32_0 = arith.constant 0 : i32
    return %arg0, %c0_i32 : i32, i32
  }
  func.func @transform_1(%arg0: i32) -> (i32, i32) {
    %c0_i32 = arith.constant 0 : i32
    %c0_i32_0 = arith.constant 0 : i32
    %c0_i32_1 = arith.constant 0 : i32
    return %c0_i32, %c0_i32_0 : i32, i32
  }
  func.func @transform_2(%arg0: i32) -> (i32, i32) {
    %c0_i32 = arith.constant 0 : i32
    %c0_i32_0 = arith.constant 0 : i32
    %c0_i32_1 = arith.constant 0 : i32
    return %c0_i32, %c0_i32_0 : i32, i32
  }
  func.func @transform_3(%arg0: i32) -> (i32, i32) {
    %c0_i32 = arith.constant 0 : i32
    %c0_i32_0 = arith.constant 0 : i32
    %c0_i32_1 = arith.constant 0 : i32
    return %c0_i32, %c0_i32_0 : i32, i32
  }
  func.func @transform_4(%arg0: i32) -> (i32, i32) {
    %c0_i32 = arith.constant 0 : i32
    %c0_i32_0 = arith.constant 0 : i32
    %c0_i32_1 = arith.constant 0 : i32
    return %c0_i32, %c0_i32_0 : i32, i32
  }
  func.func @transform_5(%arg0: i32) -> (i32, i32) {
    %c0_i32 = arith.constant 0 : i32
    %c0_i32_0 = arith.constant 0 : i32
    %c0_i32_1 = arith.constant 0 : i32
    return %c0_i32, %c0_i32_0 : i32, i32
  }
  func.func @transform_6(%arg0: i32) -> (i32, i32) {
    %c0_i32 = arith.constant 0 : i32
    %c0_i32_0 = arith.constant 0 : i32
    %c0_i32_1 = arith.constant 0 : i32
    return %c0_i32, %c0_i32_0 : i32, i32
  }
  func.func @transform_7(%arg0: i32) -> (i32, i32) {
    %c0_i32 = arith.constant 0 : i32
    %c0_i32_0 = arith.constant 0 : i32
    %c0_i32_1 = arith.constant 0 : i32
    return %c0_i32, %c0_i32_0 : i32, i32
  }
  func.func @transform_8(%arg0: i32) -> (i32, i32) {
    %c0_i32 = arith.constant 0 : i32
    %c0_i32_0 = arith.constant 0 : i32
    %c0_i32_1 = arith.constant 0 : i32
    return %c0_i32, %c0_i32_0 : i32, i32
  }
  func.func @transform_9(%arg0: i32) -> (i32, i32) {
    %c0_i32 = arith.constant 0 : i32
    %c0_i32_0 = arith.constant 0 : i32
    return %arg0, %c0_i32 : i32, i32
  }
}

</mosaic_0001>

<llo_original>
// kernel: xy_net_forward.1
$region0: #{xy_net_forward.1}
  #allocation0 [shape = 'u32[]', space=smem, size = 0x4, offset = 0x4, fixed_abs, tag = 'smem constant byte address 0x4 - core index']
  #allocation1 [shape = 'u32[144,128]{1,0:T(1,128)}', space=vmem, size = 0x12000, scoped, tag = 'internal scratch']
  %s0 = inlined_call_operand.hbm [shape: f32[8,350], index: 0, kind: input, shape index: {}]
  %s1 = inlined_call_operand.hbm [shape: bf16[350,256], index: 1, kind: input, shape index: {}]
  %s2 = inlined_call_operand.hbm [shape: f32[1,256], index: 2, kind: input, shape index: {}]
  %s3 = inlined_call_operand.hbm [shape: bf16[256,128], index: 3, kind: input, shape index: {}]
  %s4 = inlined_call_operand.hbm [shape: f32[1,128], index: 4, kind: input, shape index: {}]
  %s5 = inlined_call_operand.hbm [shape: bf16[128,128], index: 5, kind: input, shape index: {}]
  %s6 = inlined_call_operand.hbm [shape: f32[1,128], index: 6, kind: input, shape index: {}]
  %s7 = inlined_call_operand.hbm [shape: bf16[128,3], index: 7, kind: input, shape index: {}]
  %s8 = inlined_call_operand.hbm [shape: f32[1,3], index: 8, kind: input, shape index: {}]
  %s9 = inlined_call_operand.hbm [shape: f32[8,3], index: 9, kind: output, shape index: {}]
  %s10 = sld [smem:[#allocation0]]
  $region82: #{xy_net_forward.1} parent=0
    _
  %s12 = ssub.s32 1, %s10
  %s13 = scalar_select 0, %s12, %s10
  $region1: #{xy_net_forward.1} parent=0
    #allocation2 [shape = 'u8[12288]{0}', space=vmem, size = 0x3000, scoped, tag = 'input window, operand 0, single buffered']
    #allocation3 [shape = 's32[1]{0}', space=sflag, size = 0x4, scoped, tag = 'scoped memory for xy_net_forward.1']
    #allocation4 [shape = 's32[1]{0}', space=sflag, size = 0x4, scoped, tag = 'scoped memory for xy_net_forward.1']
    #allocation5 [shape = 'u8[180224]{0}', space=vmem, size = 0x2c000, scoped, tag = 'input window, operand 1, single buffered']
    #allocation6 [shape = 's32[1]{0}', space=sflag, size = 0x4, scoped, tag = 'scoped memory for xy_net_forward.1']
    #allocation7 [shape = 'u8[1024]{0}', space=vmem, size = 0x400, scoped, tag = 'input window, operand 2, single buffered']
    #allocation8 [shape = 'u8[65536]{0}', space=vmem, size = 0x10000, scoped, tag = 'input window, operand 3, single buffered']
    #allocation9 [shape = 's32[1]{0}', space=sflag, size = 0x4, scoped, tag = 'scoped memory for xy_net_forward.1']
    #allocation10 [shape = 'u8[512]{0}', space=vmem, size = 0x400, scoped, tag = 'input window, operand 4, single buffered']
    #allocation11 [shape = 'u8[32768]{0}', space=vmem, size = 0x8000, scoped, tag = 'input window, operand 5, single buffered']
    #allocation12 [shape = 's32[1]{0}', space=sflag, size = 0x4, scoped, tag = 'scoped memory for xy_net_forward.1']
    #allocation13 [shape = 'u8[512]{0}', space=vmem, size = 0x400, scoped, tag = 'input window, operand 6, single buffered']
    #allocation14 [shape = 'u8[32768]{0}', space=vmem, size = 0x8000, scoped, tag = 'input window, operand 7, single buffered']
    #allocation15 [shape = 's32[1]{0}', space=sflag, size = 0x4, scoped, tag = 'scoped memory for xy_net_forward.1']
    #allocation16 [shape = 'u8[512]{0}', space=vmem, size = 0x400, scoped, tag = 'input window, operand 8, single buffered']
    #allocation17 [shape = 'u8[4096]{0}', space=vmem, size = 0x1000, scoped, tag = 'output window, operand 0, single buffered']
    %14 = vsyncpa [#allocation3], 0
    %15 = vsyncpa [#allocation6], 0
    %16 = vsyncpa [#allocation9], 0
    %17 = vsyncpa [#allocation12], 0
    %18 = vsyncpa [#allocation15], 0
    %19 = vsyncpa [#allocation4], 0
    // Predicated region
    $region2: #{xy_net_forward.1} parent=1 // pred_check
      _
    $region3: #{xy_net_forward.1} parent=1 // pred_check_branch
      %21 = sbr.rel (0) target = $region5
    $region4: #{xy_net_forward.1} parent=1 // pred_region
      %s23 = ssub.s32 384, 384
      %24 = vsyncadd [#allocation3], %s23
      %s26 = sshll.u32 [#allocation2], 4
      %s27 = int_to_ptr.vmem [resolvable:$true] %s26
      %29 = dma.hbm_to_vmem [thread:$0]  %s0, 384, %s27, [#allocation3]
    $region5: #{xy_net_forward.1} parent=1 // pred_fallthru
      _
    // Predicated region
    $region6: #{xy_net_forward.1} parent=1 // pred_check
      _
    $region7: #{xy_net_forward.1} parent=1 // pred_check_branch
      %31 = sbr.rel (0) target = $region9
    $region8: #{xy_net_forward.1} parent=1 // pred_region
      %s33 = ssub.s32 5632, 5632
      %34 = vsyncadd [#allocation6], %s33
      %s35 = sshll.u32 [#allocation5], 4
      %s36 = int_to_ptr.vmem [resolvable:$true] %s35
      %41 = dma.hbm_to_vmem [thread:$0]  %s1, 5632, %s36, [#allocation6], 128, 128, 8
    $region9: #{xy_net_forward.1} parent=1 // pred_fallthru
      _
    // Predicated region
    $region10: #{xy_net_forward.1} parent=1 // pred_check
      _
    $region11: #{xy_net_forward.1} parent=1 // pred_check_branch
      %43 = sbr.rel (0) target = $region13
    $region12: #{xy_net_forward.1} parent=1 // pred_region
      %s45 = ssub.s32 32, 32
      %46 = vsyncadd [#allocation6], %s45
      %s48 = sshll.u32 [#allocation7], 4
      %s49 = int_to_ptr.vmem [resolvable:$true] %s48
      %51 = dma.hbm_to_vmem [thread:$0]  %s2, 32, %s49, [#allocation6]
    $region13: #{xy_net_forward.1} parent=1 // pred_fallthru
      _
    // Predicated region
    $region14: #{xy_net_forward.1} parent=1 // pred_check
      _
    $region15: #{xy_net_forward.1} parent=1 // pred_check_branch
      %53 = sbr.rel (0) target = $region17
    $region16: #{xy_net_forward.1} parent=1 // pred_region
      %s55 = ssub.s32 2048, 2048
      %56 = vsyncadd [#allocation9], %s55
      %s57 = sshll.u32 [#allocation8], 4
      %s58 = int_to_ptr.vmem [resolvable:$true] %s57
      %63 = dma.hbm_to_vmem [thread:$0]  %s3, 2048, %s58, [#allocation9], 64, 64, 4
    $region17: #{xy_net_forward.1} parent=1 // pred_fallthru
      _
    // Predicated region
    $region18: #{xy_net_forward.1} parent=1 // pred_check
      _
    $region19: #{xy_net_forward.1} parent=1 // pred_check_branch
      %65 = sbr.rel (0) target = $region21
    $region20: #{xy_net_forward.1} parent=1 // pred_region
      %s67 = ssub.s32 16, 16
      %68 = vsyncadd [#allocation9], %s67
      %s70 = sshll.u32 [#allocation10], 4
      %s71 = int_to_ptr.vmem [resolvable:$true] %s70
      %73 = dma.hbm_to_vmem [thread:$0]  %s4, 16, %s71, [#allocation9]
    $region21: #{xy_net_forward.1} parent=1 // pred_fallthru
      _
    // Predicated region
    $region22: #{xy_net_forward.1} parent=1 // pred_check
      _
    $region23: #{xy_net_forward.1} parent=1 // pred_check_branch
      %75 = sbr.rel (0) target = $region25
    $region24: #{xy_net_forward.1} parent=1 // pred_region
      %s77 = ssub.s32 1024, 1024
      %78 = vsyncadd [#allocation12], %s77
      %s79 = sshll.u32 [#allocation11], 4
      %s80 = int_to_ptr.vmem [resolvable:$true] %s79
      %85 = dma.hbm_to_vmem [thread:$0]  %s5, 1024, %s80, [#allocation12], 64, 64, 4
    $region25: #{xy_net_forward.1} parent=1 // pred_fallthru
      _
    // Predicated region
    $region26: #{xy_net_forward.1} parent=1 // pred_check
      _
    $region27: #{xy_net_forward.1} parent=1 // pred_check_branch
      %87 = sbr.rel (0) target = $region29
    $region28: #{xy_net_forward.1} parent=1 // pred_region
      %s89 = ssub.s32 16, 16
      %90 = vsyncadd [#allocation12], %s89
      %s92 = sshll.u32 [#allocation13], 4
      %s93 = int_to_ptr.vmem [resolvable:$true] %s92
      %95 = dma.hbm_to_vmem [thread:$0]  %s6, 16, %s93, [#allocation12]
    $region29: #{xy_net_forward.1} parent=1 // pred_fallthru
      _
    // Predicated region
    $region30: #{xy_net_forward.1} parent=1 // pred_check
      _
    $region31: #{xy_net_forward.1} parent=1 // pred_check_branch
      %97 = sbr.rel (0) target = $region33
    $region32: #{xy_net_forward.1} parent=1 // pred_region
      %s99 = ssub.s32 1024, 1024
      %100 = vsyncadd [#allocation15], %s99
      %s101 = sshll.u32 [#allocation14], 4
      %s102 = int_to_ptr.vmem [resolvable:$true] %s101
      %107 = dma.hbm_to_vmem [thread:$0]  %s7, 1024, %s102, [#allocation15], 64, 64, 4
    $region33: #{xy_net_forward.1} parent=1 // pred_fallthru
      _
    // Predicated region
    $region34: #{xy_net_forward.1} parent=1 // pred_check
      _
    $region35: #{xy_net_forward.1} parent=1 // pred_check_branch
      %109 = sbr.rel (0) target = $region37
    $region36: #{xy_net_forward.1} parent=1 // pred_region
      %s111 = ssub.s32 16, 16
      %112 = vsyncadd [#allocation15], %s111
      %s114 = sshll.u32 [#allocation16], 4
      %s115 = int_to_ptr.vmem [resolvable:$true] %s114
      %117 = dma.hbm_to_vmem [thread:$0]  %s8, 16, %s115, [#allocation15]
    $region37: #{xy_net_forward.1} parent=1 // pred_fallthru
      _
    // Predicated region
    $region38: #{xy_net_forward.1} parent=1 // pred_check
      _
    $region39: #{xy_net_forward.1} parent=1 // pred_check_branch
      %119 = sbr.rel (0) target = $region41
    $region40: #{xy_net_forward.1} parent=1 // pred_region
      %120 = dma.done [#allocation3], 384
    $region41: #{xy_net_forward.1} parent=1 // pred_fallthru
      _
    // Predicated region
    $region42: #{xy_net_forward.1} parent=1 // pred_check
      _
    $region43: #{xy_net_forward.1} parent=1 // pred_check_branch
      %122 = sbr.rel (0) target = $region45
    $region44: #{xy_net_forward.1} parent=1 // pred_region
      %123 = dma.done [#allocation6], 5632
    $region45: #{xy_net_forward.1} parent=1 // pred_fallthru
      _
    // Predicated region
    $region46: #{xy_net_forward.1} parent=1 // pred_check
      _
    $region47: #{xy_net_forward.1} parent=1 // pred_check_branch
      %125 = sbr.rel (0) target = $region49
    $region48: #{xy_net_forward.1} parent=1 // pred_region
      %126 = dma.done [#allocation6], 32
    $region49: #{xy_net_forward.1} parent=1 // pred_fallthru
      _
    // Predicated region
    $region50: #{xy_net_forward.1} parent=1 // pred_check
      _
    $region51: #{xy_net_forward.1} parent=1 // pred_check_branch
      %128 = sbr.rel (0) target = $region53
    $region52: #{xy_net_forward.1} parent=1 // pred_region
      %129 = dma.done [#allocation9], 2048
    $region53: #{xy_net_forward.1} parent=1 // pred_fallthru
      _
    // Predicated region
    $region54: #{xy_net_forward.1} parent=1 // pred_check
      _
    $region55: #{xy_net_forward.1} parent=1 // pred_check_branch
      %131 = sbr.rel (0) target = $region57
    $region56: #{xy_net_forward.1} parent=1 // pred_region
      %132 = dma.done [#allocation9], 16
    $region57: #{xy_net_forward.1} parent=1 // pred_fallthru
      _
    // Predicated region
    $region58: #{xy_net_forward.1} parent=1 // pred_check
      _
    $region59: #{xy_net_forward.1} parent=1 // pred_check_branch
      %134 = sbr.rel (0) target = $region61
    $region60: #{xy_net_forward.1} parent=1 // pred_region
      %135 = dma.done [#allocation12], 1024
    $region61: #{xy_net_forward.1} parent=1 // pred_fallthru
      _
    // Predicated region
    $region62: #{xy_net_forward.1} parent=1 // pred_check
      _
    $region63: #{xy_net_forward.1} parent=1 // pred_check_branch
      %137 = sbr.rel (0) target = $region65
    $region64: #{xy_net_forward.1} parent=1 // pred_region
      %138 = dma.done [#allocation12], 16
    $region65: #{xy_net_forward.1} parent=1 // pred_fallthru
      _
    // Predicated region
    $region66: #{xy_net_forward.1} parent=1 // pred_check
      _
    $region67: #{xy_net_forward.1} parent=1 // pred_check_branch
      %140 = sbr.rel (0) target = $region69
    $region68: #{xy_net_forward.1} parent=1 // pred_region
      %141 = dma.done [#allocation15], 1024
    $region69: #{xy_net_forward.1} parent=1 // pred_fallthru
      _
    // Predicated region
    $region70: #{xy_net_forward.1} parent=1 // pred_check
      _
    $region71: #{xy_net_forward.1} parent=1 // pred_check_branch
      %143 = sbr.rel (0) target = $region73
    $region72: #{xy_net_forward.1} parent=1 // pred_region
      %144 = dma.done [#allocation15], 16
    $region73: #{xy_net_forward.1} parent=1 // pred_fallthru
      _
    %v146 = vld [vmem:[#allocation2] sm:$0xff]
    %v147 = vld [vmem:[#allocation2 + $0x8] sm:$0xff]
    %v148 = vld [vmem:[#allocation2 + $0x10] sm:$0xff]
    %v149 = vpack.c.bf16 %v146, %v146
    %v150 = vpack.c.bf16 %v147, %v147
    %v151 = vpack.c.bf16 %v148, %v148
    %v152 = vld [vmem:[#allocation5] sm:$0xff]
    %v153 = vld [vmem:[#allocation5 + $0x8] sm:$0xff]
    %v154 = vld [vmem:[#allocation5 + $0x10] sm:$0xff]
    %v155 = vld [vmem:[#allocation5 + $0x18] sm:$0xff]
    %v156 = vld [vmem:[#allocation5 + $0x20] sm:$0xff]
    %v157 = vld [vmem:[#allocation5 + $0x28] sm:$0xff]
    %v158 = vld [vmem:[#allocation5 + $0x30] sm:$0xff]
    %v159 = vld [vmem:[#allocation5 + $0x38] sm:$0xff]
    %v160 = vld [vmem:[#allocation5 + $0x40] sm:$0xff]
    %v161 = vld [vmem:[#allocation5 + $0x48] sm:$0xff]
    %v162 = vld [vmem:[#allocation5 + $0x50] sm:$0xff]
    %v163 = vld [vmem:[#allocation5 + $0x58] sm:$0xff]
    %v164 = vld [vmem:[#allocation5 + $0x60] sm:$0xff]
    %v165 = vld [vmem:[#allocation5 + $0x68] sm:$0xff]
    %v166 = vld [vmem:[#allocation5 + $0x70] sm:$0xff]
    %v167 = vld [vmem:[#allocation5 + $0x78] sm:$0xff]
    %v168 = vld [vmem:[#allocation5 + $0x80] sm:$0xff]
    %v169 = vld [vmem:[#allocation5 + $0x88] sm:$0xff]
    %v170 = vld [vmem:[#allocation5 + $0x90] sm:$0xff]
    %v171 = vld [vmem:[#allocation5 + $0x98] sm:$0xff]
    %v172 = vld [vmem:[#allocation5 + $0xa0] sm:$0xff]
    %v173 = vld [vmem:[#allocation5 + $0xa8] sm:$0xff]
    %v174 = vld [vmem:[#allocation5 + $0xb0] sm:$0xff]
    %v175 = vld [vmem:[#allocation5 + $0xb8] sm:$0xff]
    %v176 = vld [vmem:[#allocation5 + $0xc0] sm:$0xff]
    %v177 = vld [vmem:[#allocation5 + $0xc8] sm:$0xff]
    %v178 = vld [vmem:[#allocation5 + $0xd0] sm:$0xff]
    %v179 = vld [vmem:[#allocation5 + $0xd8] sm:$0xff]
    %v180 = vld [vmem:[#allocation5 + $0xe0] sm:$0xff]
    %v181 = vld [vmem:[#allocation5 + $0xe8] sm:$0xff]
    %v182 = vld [vmem:[#allocation5 + $0xf0] sm:$0xff]
    %v183 = vld [vmem:[#allocation5 + $0xf8] sm:$0xff]
    %v184 = vld [vmem:[#allocation5 + $0x100] sm:$0xff]
    %v185 = vld [vmem:[#allocation5 + $0x108] sm:$0xff]
    %v186 = vld [vmem:[#allocation5 + $0x110] sm:$0xff]
    %v187 = vld [vmem:[#allocation5 + $0x118] sm:$0xff]
    %v188 = vld [vmem:[#allocation5 + $0x120] sm:$0xff]
    %v189 = vld [vmem:[#allocation5 + $0x128] sm:$0xff]
    %v190 = vld [vmem:[#allocation5 + $0x130] sm:$0xff]
    %v191 = vld [vmem:[#allocation5 + $0x138] sm:$0xff]
    %v192 = vld [vmem:[#allocation5 + $0x140] sm:$0xff]
    %v193 = vld [vmem:[#allocation5 + $0x148] sm:$0xff]
    %v194 = vld [vmem:[#allocation5 + $0x150] sm:$0xff]
    %v195 = vld [vmem:[#allocation5 + $0x158] sm:$0x77]
    %v196 = vld [vmem:[#allocation7] sm:$0x3]
    %v198 = vlaneseq
    %v199 = vshrl.u32 %v198, 7
    %v200 = vsub.s32 0, %v199
    %v201 = vrot.slane %v196, %v200
    %v202 = vlaneseq
    %v203 = vshrl.u32 %v202, 7
    %v204 = vsub.s32 1, %v203
    %v205 = vrot.slane %v196, %v204
    %v252 = vunpack.c.l.b16 %v152
    %v253 = vunpack.c.h.b16 %v152
    %v254 = vunpack.c.l.b16 %v153
    %v255 = vunpack.c.h.b16 %v153
    %v256 = vunpack.c.l.b16 %v154
    %v257 = vunpack.c.h.b16 %v154
    %v258 = vunpack.c.l.b16 %v155
    %v259 = vunpack.c.h.b16 %v155
    %v260 = vunpack.c.l.b16 %v156
    %v261 = vunpack.c.h.b16 %v156
    %v262 = vunpack.c.l.b16 %v157
    %v263 = vunpack.c.h.b16 %v157
    %v264 = vunpack.c.l.b16 %v158
    %v265 = vunpack.c.h.b16 %v158
    %v266 = vunpack.c.l.b16 %v159
    %v267 = vunpack.c.h.b16 %v159
    %v268 = vunpack.c.l.b16 %v160
    %v269 = vunpack.c.h.b16 %v160
    %v270 = vunpack.c.l.b16 %v161
    %v271 = vunpack.c.h.b16 %v161
    %v272 = vunpack.c.l.b16 %v162
    %v273 = vunpack.c.h.b16 %v162
    %v274 = vunpack.c.l.b16 %v163
    %v275 = vunpack.c.h.b16 %v163
    %v276 = vunpack.c.l.b16 %v164
    %v277 = vunpack.c.h.b16 %v164
    %v278 = vunpack.c.l.b16 %v165
    %v279 = vunpack.c.h.b16 %v165
    %v280 = vunpack.c.l.b16 %v166
    %v281 = vunpack.c.h.b16 %v166
    %v282 = vunpack.c.l.b16 %v167
    %v283 = vunpack.c.h.b16 %v167
    %v284 = vunpack.c.l.b16 %v168
    %v285 = vunpack.c.h.b16 %v168
    %v286 = vunpack.c.l.b16 %v169
    %v287 = vunpack.c.h.b16 %v169
    %v288 = vunpack.c.l.b16 %v170
    %v289 = vunpack.c.h.b16 %v170
    %v290 = vunpack.c.l.b16 %v171
    %v291 = vunpack.c.h.b16 %v171
    %v292 = vunpack.c.l.b16 %v172
    %v293 = vunpack.c.h.b16 %v172
    %v294 = vunpack.c.l.b16 %v173
    %v295 = vunpack.c.h.b16 %v173
    %v296 = vunpack.c.l.b16 %v174
    %v297 = vunpack.c.h.b16 %v174
    %v298 = vunpack.c.l.b16 %v175
    %v299 = vunpack.c.h.b16 %v175
    %v300 = vunpack.c.l.b16 %v176
    %v301 = vunpack.c.h.b16 %v176
    %v302 = vunpack.c.l.b16 %v177
    %v303 = vunpack.c.h.b16 %v177
    %v304 = vunpack.c.l.b16 %v178
    %v305 = vunpack.c.h.b16 %v178
    %v306 = vunpack.c.l.b16 %v179
    %v307 = vunpack.c.h.b16 %v179
    %v308 = vunpack.c.l.b16 %v180
    %v309 = vunpack.c.h.b16 %v180
    %v310 = vunpack.c.l.b16 %v181
    %v311 = vunpack.c.h.b16 %v181
    %v312 = vunpack.c.l.b16 %v182
    %v313 = vunpack.c.h.b16 %v182
    %v314 = vunpack.c.l.b16 %v183
    %v315 = vunpack.c.h.b16 %v183
    %v316 = vunpack.c.l.b16 %v184
    %v317 = vunpack.c.h.b16 %v184
    %v318 = vunpack.c.l.b16 %v185
    %v319 = vunpack.c.h.b16 %v185
    %v320 = vunpack.c.l.b16 %v186
    %v321 = vunpack.c.h.b16 %v186
    %v322 = vunpack.c.l.b16 %v187
    %v323 = vunpack.c.h.b16 %v187
    %v324 = vunpack.c.l.b16 %v188
    %v325 = vunpack.c.h.b16 %v188
    %v326 = vunpack.c.l.b16 %v189
    %v327 = vunpack.c.h.b16 %v189
    %v328 = vunpack.c.l.b16 %v190
    %v329 = vunpack.c.h.b16 %v190
    %v330 = vunpack.c.l.b16 %v191
    %v331 = vunpack.c.h.b16 %v191
    %v332 = vunpack.c.l.b16 %v192
    %v333 = vunpack.c.h.b16 %v192
    %v334 = vunpack.c.l.b16 %v193
    %v335 = vunpack.c.h.b16 %v193
    %v336 = vunpack.c.l.b16 %v194
    %v337 = vunpack.c.h.b16 %v194
    %v338 = vunpack.c.l.b16 %v195
    %v339 = vunpack.c.h.b16 %v195
    %v340 = vpack.c.b16 %v254, %v252
    %v341 = vpack.c.b16 %v255, %v253
    %v342 = vpack.c.b16 %v258, %v256
    %v343 = vpack.c.b16 %v259, %v257
    %v344 = vpack.c.b16 %v262, %v260
    %v345 = vpack.c.b16 %v263, %v261
    %v346 = vpack.c.b16 %v266, %v264
    %v347 = vpack.c.b16 %v267, %v265
    %v348 = vpack.c.b16 %v270, %v268
    %v349 = vpack.c.b16 %v271, %v269
    %v350 = vpack.c.b16 %v274, %v272
    %v351 = vpack.c.b16 %v275, %v273
    %v352 = vpack.c.b16 %v278, %v276
    %v353 = vpack.c.b16 %v279, %v277
    %v354 = vpack.c.b16 %v282, %v280
    %v355 = vpack.c.b16 %v283, %v281
    %v356 = vpack.c.b16 %v286, %v284
    %v357 = vpack.c.b16 %v287, %v285
    %v358 = vpack.c.b16 %v290, %v288
    %v359 = vpack.c.b16 %v291, %v289
    %v360 = vpack.c.b16 %v294, %v292
    %v361 = vpack.c.b16 %v295, %v293
    %v362 = vpack.c.b16 %v298, %v296
    %v363 = vpack.c.b16 %v299, %v297
    %v364 = vpack.c.b16 %v302, %v300
    %v365 = vpack.c.b16 %v303, %v301
    %v366 = vpack.c.b16 %v306, %v304
    %v367 = vpack.c.b16 %v307, %v305
    %v368 = vpack.c.b16 %v310, %v308
    %v369 = vpack.c.b16 %v311, %v309
    %v370 = vpack.c.b16 %v314, %v312
    %v371 = vpack.c.b16 %v315, %v313
    %v372 = vpack.c.b16 %v318, %v316
    %v373 = vpack.c.b16 %v319, %v317
    %v374 = vpack.c.b16 %v322, %v320
    %v375 = vpack.c.b16 %v323, %v321
    %v376 = vpack.c.b16 %v326, %v324
    %v377 = vpack.c.b16 %v327, %v325
    %v378 = vpack.c.b16 %v330, %v328
    %v379 = vpack.c.b16 %v331, %v329
    %v380 = vpack.c.b16 %v334, %v332
    %v381 = vpack.c.b16 %v335, %v333
    %v382 = vpack.c.b16 %v338, %v336
    %v383 = vpack.c.b16 %v339, %v337
    %vm426 = vcmask 769024
    %v428 = vsel %vm426, %v151, 0
    %vm430 = vcmask 1046528
    %v432 = vsel %vm430, %v382, 0
    %v435 = vsel %vm430, %v383, 0
    %437 = vmatprep.subr.bf16.mxu0 %v341
    %438 = vmatpush1.bf16.msra.mxu0 %v340
    %439 = vmatprep.subr.bf16.mxu0 %v343
    %440 = vmatpush1.bf16.msra.mxu0 %v342
    %441 = vmatprep.subr.bf16.mxu0 %v345
    %442 = vmatpush1.bf16.msra.mxu0 %v344
    %443 = vmatprep.subr.bf16.mxu0 %v347
    %444 = vmatpush1.bf16.msra.mxu0 %v346
    %445 = vmatprep.subr.bf16.mxu0 %v349
    %446 = vmatpush1.bf16.msra.mxu0 %v348
    %447 = vmatprep.subr.bf16.mxu0 %v351
    %448 = vmatpush1.bf16.msra.mxu0 %v350
    %449 = vmatprep.subr.bf16.mxu0 %v353
    %450 = vmatpush1.bf16.msra.mxu0 %v352
    %451 = vmatprep.subr.bf16.mxu0 %v355
    %452 = vmatpush1.bf16.msra.mxu0 %v354
    %453 = vmatprep.subr.bf16.mxu0 %v357
    %454 = vmatpush1.bf16.msra.mxu0 %v356
    %455 = vmatprep.subr.bf16.mxu0 %v359
    %456 = vmatpush1.bf16.msra.mxu0 %v358
    %457 = vmatprep.subr.bf16.mxu0 %v361
    %458 = vmatpush1.bf16.msra.mxu0 %v360
    %459 = vmatprep.subr.bf16.mxu0 %v363
    %460 = vmatpush1.bf16.msra.mxu0 %v362
    %461 = vmatprep.subr.bf16.mxu0 %v365
    %462 = vmatpush1.bf16.msra.mxu0 %v364
    %463 = vmatprep.subr.bf16.mxu0 %v367
    %464 = vmatpush1.bf16.msra.mxu0 %v366
    %465 = vmatprep.subr.bf16.mxu0 %v369
    %466 = vmatpush1.bf16.msra.mxu0 %v368
    %467 = vmatprep.subr.bf16.mxu0 %v371
    %468 = vmatpush1.bf16.msra.mxu0 %v370
    %469 = vmatprep.mubr.bf16.mxu0 %v150
    %470 = vmatmul.mubr.bf16.gmra.mrb[0].mxu0 %v149
    %v471 = vpop.f32.mrb[0].mxu0
    %v472 = vadd.f32 %v201, %v471
    %v473 = vpop.f32.mrb[0].mxu0
    %v474 = vadd.f32 %v205, %v473
    %v475 = vpop.f32.mrb[0].mxu0
    %v476 = vpop.f32.mrb[0].mxu0
    %477 = vdwg.mxu0
    %478 = vmatprep.subr.bf16.mxu0 %v373
    %479 = vmatpush1.bf16.msra.mxu0 %v372
    %480 = vmatprep.subr.bf16.mxu0 %v375
    %481 = vmatpush1.bf16.msra.mxu0 %v374
    %482 = vmatprep.subr.bf16.mxu0 %v377
    %483 = vmatpush1.bf16.msra.mxu0 %v376
    %484 = vmatprep.subr.bf16.mxu0 %v379
    %485 = vmatpush1.bf16.msra.mxu0 %v378
    %486 = vmatprep.subr.bf16.mxu0 %v381
    %487 = vmatpush1.bf16.msra.mxu0 %v380
    %488 = vmatprep.subr.bf16.mxu0 %v435
    %489 = vmatpush1.bf16.msra.mxu0 %v432
    %490 = vmatprep.subr.bf16.mxu0 0
    %491 = vmatpush1.bf16.msra.mxu0 0
    %492 = vmatprep.subr.bf16.mxu0 0
    %493 = vmatpush1.bf16.msra.mxu0 0
    %494 = vmatprep.subr.bf16.mxu0 0
    %495 = vmatpush1.bf16.msra.mxu0 0
    %496 = vmatprep.subr.bf16.mxu0 0
    %497 = vmatpush1.bf16.msra.mxu0 0
    %498 = vmatprep.subr.bf16.mxu0 0
    %499 = vmatpush1.bf16.msra.mxu0 0
    %500 = vmatprep.subr.bf16.mxu0 0
    %501 = vmatpush1.bf16.msra.mxu0 0
    %502 = vmatprep.subr.bf16.mxu0 0
    %503 = vmatpush1.bf16.msra.mxu0 0
    %504 = vmatprep.subr.bf16.mxu0 0
    %505 = vmatpush1.bf16.msra.mxu0 0
    %506 = vmatprep.subr.bf16.mxu0 0
    %507 = vmatpush1.bf16.msra.mxu0 0
    %508 = vmatprep.subr.bf16.mxu0 0
    %509 = vmatpush1.bf16.msra.mxu0 0
    %510 = vmatprep.mubr.bf16.mxu0 0
    %511 = vmatmul.mubr.bf16.gmra.mrb[0].mxu0 %v428
    %v512 = vpop.f32.mrb[0].mxu0
    %v513 = vadd.f32 %v472, %v512
    %v514 = vpop.f32.mrb[0].mxu0
    %v515 = vadd.f32 %v474, %v514
    %v516 = vpop.f32.mrb[0].mxu0
    %v517 = vpop.f32.mrb[0].mxu0
    %518 = vdwg.mxu0
    %v519 = vmul.f32 %v513, 0.5
    %v520 = vmul.f32 %v515, 0.5
    %v521 = vtanh.pop %v519
    %v522 = vtanh.pop %v520
    %v523 = vmul.f32 %v521, 0.5
    %v524 = vmul.f32 %v522, 0.5
    %v525 = vadd.f32 %v523, 0.5
    %v526 = vadd.f32 %v524, 0.5
    %v527 = vpack.c.bf16 %v525, %v525
    %v528 = vpack.c.bf16 %v526, %v526
    %v529 = vld [vmem:[#allocation8] sm:$0xf]
    %v530 = vld [vmem:[#allocation8 + $0x4] sm:$0xf]
    %v531 = vld [vmem:[#allocation8 + $0x8] sm:$0xf]
    %v532 = vld [vmem:[#allocation8 + $0xc] sm:$0xf]
    %v533 = vld [vmem:[#allocation8 + $0x10] sm:$0xf]
    %v534 = vld [vmem:[#allocation8 + $0x14] sm:$0xf]
    %v535 = vld [vmem:[#allocation8 + $0x18] sm:$0xf]
    %v536 = vld [vmem:[#allocation8 + $0x1c] sm:$0xf]
    %v537 = vld [vmem:[#allocation8 + $0x20] sm:$0xf]
    %v538 = vld [vmem:[#allocation8 + $0x24] sm:$0xf]
    %v539 = vld [vmem:[#allocation8 + $0x28] sm:$0xf]
    %v540 = vld [vmem:[#allocation8 + $0x2c] sm:$0xf]
    %v541 = vld [vmem:[#allocation8 + $0x30] sm:$0xf]
    %v542 = vld [vmem:[#allocation8 + $0x34] sm:$0xf]
    %v543 = vld [vmem:[#allocation8 + $0x38] sm:$0xf]
    %v544 = vld [vmem:[#allocation8 + $0x3c] sm:$0xf]
    %v545 = vld [vmem:[#allocation8 + $0x40] sm:$0xf]
    %v546 = vld [vmem:[#allocation8 + $0x44] sm:$0xf]
    %v547 = vld [vmem:[#allocation8 + $0x48] sm:$0xf]
    %v548 = vld [vmem:[#allocation8 + $0x4c] sm:$0xf]
    %v549 = vld [vmem:[#allocation8 + $0x50] sm:$0xf]
    %v550 = vld [vmem:[#allocation8 + $0x54] sm:$0xf]
    %v551 = vld [vmem:[#allocation8 + $0x58] sm:$0xf]
    %v552 = vld [vmem:[#allocation8 + $0x5c] sm:$0xf]
    %v553 = vld [vmem:[#allocation8 + $0x60] sm:$0xf]
    %v554 = vld [vmem:[#allocation8 + $0x64] sm:$0xf]
    %v555 = vld [vmem:[#allocation8 + $0x68] sm:$0xf]
    %v556 = vld [vmem:[#allocation8 + $0x6c] sm:$0xf]
    %v557 = vld [vmem:[#allocation8 + $0x70] sm:$0xf]
    %v558 = vld [vmem:[#allocation8 + $0x74] sm:$0xf]
    %v559 = vld [vmem:[#allocation8 + $0x78] sm:$0xf]
    %v560 = vld [vmem:[#allocation8 + $0x7c] sm:$0xf]
    %v561 = vld [vmem:[#allocation10] sm:$0x1]
    %v563 = vlaneseq
    %v564 = vshrl.u32 %v563, 7
    %v565 = vsub.s32 0, %v564
    %v566 = vrot.slane %v561, %v565
    %v600 = vunpack.c.l.b16 %v529
    %v601 = vunpack.c.l.b16 %v530
    %v602 = vunpack.c.l.b16 %v531
    %v603 = vunpack.c.l.b16 %v532
    %v604 = vunpack.c.l.b16 %v533
    %v605 = vunpack.c.l.b16 %v534
    %v606 = vunpack.c.l.b16 %v535
    %v607 = vunpack.c.l.b16 %v536
    %v608 = vunpack.c.l.b16 %v537
    %v609 = vunpack.c.l.b16 %v538
    %v610 = vunpack.c.l.b16 %v539
    %v611 = vunpack.c.l.b16 %v540
    %v612 = vunpack.c.l.b16 %v541
    %v613 = vunpack.c.l.b16 %v542
    %v614 = vunpack.c.l.b16 %v543
    %v615 = vunpack.c.l.b16 %v544
    %v616 = vunpack.c.l.b16 %v545
    %v617 = vunpack.c.l.b16 %v546
    %v618 = vunpack.c.l.b16 %v547
    %v619 = vunpack.c.l.b16 %v548
    %v620 = vunpack.c.l.b16 %v549
    %v621 = vunpack.c.l.b16 %v550
    %v622 = vunpack.c.l.b16 %v551
    %v623 = vunpack.c.l.b16 %v552
    %v624 = vunpack.c.l.b16 %v553
    %v625 = vunpack.c.l.b16 %v554
    %v626 = vunpack.c.l.b16 %v555
    %v627 = vunpack.c.l.b16 %v556
    %v628 = vunpack.c.l.b16 %v557
    %v629 = vunpack.c.l.b16 %v558
    %v630 = vunpack.c.l.b16 %v559
    %v631 = vunpack.c.l.b16 %v560
    %v632 = vpack.c.b16 %v601, %v600
    %v633 = vpack.c.b16 %v603, %v602
    %v634 = vpack.c.b16 %v605, %v604
    %v635 = vpack.c.b16 %v607, %v606
    %v636 = vpack.c.b16 %v609, %v608
    %v637 = vpack.c.b16 %v611, %v610
    %v638 = vpack.c.b16 %v613, %v612
    %v639 = vpack.c.b16 %v615, %v614
    %v640 = vpack.c.b16 %v617, %v616
    %v641 = vpack.c.b16 %v619, %v618
    %v642 = vpack.c.b16 %v621, %v620
    %v643 = vpack.c.b16 %v623, %v622
    %v644 = vpack.c.b16 %v625, %v624
    %v645 = vpack.c.b16 %v627, %v626
    %v646 = vpack.c.b16 %v629, %v628
    %v647 = vpack.c.b16 %v631, %v630
    %664 = vmatprep.subr.bf16.mxu0 0
    %665 = vmatpush1.bf16.msra.mxu0 %v632
    %666 = vmatprep.subr.bf16.mxu0 0
    %667 = vmatpush1.bf16.msra.mxu0 %v633
    %668 = vmatprep.subr.bf16.mxu0 0
    %669 = vmatpush1.bf16.msra.mxu0 %v634
    %670 = vmatprep.subr.bf16.mxu0 0
    %671 = vmatpush1.bf16.msra.mxu0 %v635
    %672 = vmatprep.subr.bf16.mxu0 0
    %673 = vmatpush1.bf16.msra.mxu0 %v636
    %674 = vmatprep.subr.bf16.mxu0 0
    %675 = vmatpush1.bf16.msra.mxu0 %v637
    %676 = vmatprep.subr.bf16.mxu0 0
    %677 = vmatpush1.bf16.msra.mxu0 %v638
    %678 = vmatprep.subr.bf16.mxu0 0
    %679 = vmatpush1.bf16.msra.mxu0 %v639
    %680 = vmatprep.subr.bf16.mxu0 0
    %681 = vmatpush1.bf16.msra.mxu0 %v640
    %682 = vmatprep.subr.bf16.mxu0 0
    %683 = vmatpush1.bf16.msra.mxu0 %v641
    %684 = vmatprep.subr.bf16.mxu0 0
    %685 = vmatpush1.bf16.msra.mxu0 %v642
    %686 = vmatprep.subr.bf16.mxu0 0
    %687 = vmatpush1.bf16.msra.mxu0 %v643
    %688 = vmatprep.subr.bf16.mxu0 0
    %689 = vmatpush1.bf16.msra.mxu0 %v644
    %690 = vmatprep.subr.bf16.mxu0 0
    %691 = vmatpush1.bf16.msra.mxu0 %v645
    %692 = vmatprep.subr.bf16.mxu0 0
    %693 = vmatpush1.bf16.msra.mxu0 %v646
    %694 = vmatprep.subr.bf16.mxu0 0
    %695 = vmatpush1.bf16.msra.mxu0 %v647
    %696 = vmatprep.mubr.bf16.mxu0 %v528
    %697 = vmatmul.mubr.bf16.gmra.mrb[0].mxu0 %v527
    %v698 = vpop.f32.mrb[0].mxu0
    %v699 = vadd.f32 %v566, %v698
    %v700 = vpop.f32.mrb[0].mxu0
    %v701 = vpop.f32.mrb[0].mxu0
    %v702 = vpop.f32.mrb[0].mxu0
    %703 = vdwg.mxu0
    %v704 = vmul.f32 %v699, 0.5
    %v705 = vtanh.pop %v704
    %v706 = vmul.f32 %v705, 0.5
    %v707 = vadd.f32 %v706, 0.5
    %v708 = vpack.c.bf16 %v707, %v707
    %v709 = vld [vmem:[#allocation11] sm:$0xf]
    %v710 = vld [vmem:[#allocation11 + $0x4] sm:$0xf]
    %v711 = vld [vmem:[#allocation11 + $0x8] sm:$0xf]
    %v712 = vld [vmem:[#allocation11 + $0xc] sm:$0xf]
    %v713 = vld [vmem:[#allocation11 + $0x10] sm:$0xf]
    %v714 = vld [vmem:[#allocation11 + $0x14] sm:$0xf]
    %v715 = vld [vmem:[#allocation11 + $0x18] sm:$0xf]
    %v716 = vld [vmem:[#allocation11 + $0x1c] sm:$0xf]
    %v717 = vld [vmem:[#allocation11 + $0x20] sm:$0xf]
    %v718 = vld [vmem:[#allocation11 + $0x24] sm:$0xf]
    %v719 = vld [vmem:[#allocation11 + $0x28] sm:$0xf]
    %v720 = vld [vmem:[#allocation11 + $0x2c] sm:$0xf]
    %v721 = vld [vmem:[#allocation11 + $0x30] sm:$0xf]
    %v722 = vld [vmem:[#allocation11 + $0x34] sm:$0xf]
    %v723 = vld [vmem:[#allocation11 + $0x38] sm:$0xf]
    %v724 = vld [vmem:[#allocation11 + $0x3c] sm:$0xf]
    %v725 = vld [vmem:[#allocation13] sm:$0x1]
    %v727 = vlaneseq
    %v728 = vshrl.u32 %v727, 7
    %v729 = vsub.s32 0, %v728
    %v730 = vrot.slane %v725, %v729
    %v748 = vunpack.c.l.b16 %v709
    %v749 = vunpack.c.l.b16 %v710
    %v750 = vunpack.c.l.b16 %v711
    %v751 = vunpack.c.l.b16 %v712
    %v752 = vunpack.c.l.b16 %v713
    %v753 = vunpack.c.l.b16 %v714
    %v754 = vunpack.c.l.b16 %v715
    %v755 = vunpack.c.l.b16 %v716
    %v756 = vunpack.c.l.b16 %v717
    %v757 = vunpack.c.l.b16 %v718
    %v758 = vunpack.c.l.b16 %v719
    %v759 = vunpack.c.l.b16 %v720
    %v760 = vunpack.c.l.b16 %v721
    %v761 = vunpack.c.l.b16 %v722
    %v762 = vunpack.c.l.b16 %v723
    %v763 = vunpack.c.l.b16 %v724
    %v764 = vpack.c.b16 %v749, %v748
    %v765 = vpack.c.b16 %v751, %v750
    %v766 = vpack.c.b16 %v753, %v752
    %v767 = vpack.c.b16 %v755, %v754
    %v768 = vpack.c.b16 %v757, %v756
    %v769 = vpack.c.b16 %v759, %v758
    %v770 = vpack.c.b16 %v761, %v760
    %v771 = vpack.c.b16 %v763, %v762
    %780 = vmatprep.subr.bf16.mxu0 0
    %781 = vmatpush1.bf16.msra.mxu0 %v764
    %782 = vmatprep.subr.bf16.mxu0 0
    %783 = vmatpush1.bf16.msra.mxu0 %v765
    %784 = vmatprep.subr.bf16.mxu0 0
    %785 = vmatpush1.bf16.msra.mxu0 %v766
    %786 = vmatprep.subr.bf16.mxu0 0
    %787 = vmatpush1.bf16.msra.mxu0 %v767
    %788 = vmatprep.subr.bf16.mxu0 0
    %789 = vmatpush1.bf16.msra.mxu0 %v768
    %790 = vmatprep.subr.bf16.mxu0 0
    %791 = vmatpush1.bf16.msra.mxu0 %v769
    %792 = vmatprep.subr.bf16.mxu0 0
    %793 = vmatpush1.bf16.msra.mxu0 %v770
    %794 = vmatprep.subr.bf16.mxu0 0
    %795 = vmatpush1.bf16.msra.mxu0 %v771
    %796 = vmatprep.subr.bf16.mxu0 0
    %797 = vmatpush1.bf16.msra.mxu0 0
    %798 = vmatprep.subr.bf16.mxu0 0
    %799 = vmatpush1.bf16.msra.mxu0 0
    %800 = vmatprep.subr.bf16.mxu0 0
    %801 = vmatpush1.bf16.msra.mxu0 0
    %802 = vmatprep.subr.bf16.mxu0 0
    %803 = vmatpush1.bf16.msra.mxu0 0
    %804 = vmatprep.subr.bf16.mxu0 0
    %805 = vmatpush1.bf16.msra.mxu0 0
    %806 = vmatprep.subr.bf16.mxu0 0
    %807 = vmatpush1.bf16.msra.mxu0 0
    %808 = vmatprep.subr.bf16.mxu0 0
    %809 = vmatpush1.bf16.msra.mxu0 0
    %810 = vmatprep.subr.bf16.mxu0 0
    %811 = vmatpush1.bf16.msra.mxu0 0
    %812 = vmatprep.mubr.bf16.mxu0 0
    %813 = vmatmul.mubr.bf16.gmra.mrb[0].mxu0 %v708
    %v814 = vpop.f32.mrb[0].mxu0
    %v815 = vadd.f32 %v730, %v814
    %v816 = vpop.f32.mrb[0].mxu0
    %v817 = vpop.f32.mrb[0].mxu0
    %v818 = vpop.f32.mrb[0].mxu0
    %819 = vdwg.mxu0
    %v820 = vmul.f32 %v815, 0.5
    %v821 = vtanh.pop %v820
    %v822 = vmul.f32 %v821, 0.5
    %v823 = vadd.f32 %v822, 0.5
    %v824 = vpack.c.bf16 %v823, %v823
    %v825 = vld [vmem:[#allocation14] sm:$0xf]
    %v826 = vld [vmem:[#allocation14 + $0x4] sm:$0xf]
    %v827 = vld [vmem:[#allocation14 + $0x8] sm:$0xf]
    %v828 = vld [vmem:[#allocation14 + $0xc] sm:$0xf]
    %v829 = vld [vmem:[#allocation14 + $0x10] sm:$0xf]
    %v830 = vld [vmem:[#allocation14 + $0x14] sm:$0xf]
    %v831 = vld [vmem:[#allocation14 + $0x18] sm:$0xf]
    %v832 = vld [vmem:[#allocation14 + $0x1c] sm:$0xf]
    %v833 = vld [vmem:[#allocation14 + $0x20] sm:$0xf]
    %v834 = vld [vmem:[#allocation14 + $0x24] sm:$0xf]
    %v835 = vld [vmem:[#allocation14 + $0x28] sm:$0xf]
    %v836 = vld [vmem:[#allocation14 + $0x2c] sm:$0xf]
    %v837 = vld [vmem:[#allocation14 + $0x30] sm:$0xf]
    %v838 = vld [vmem:[#allocation14 + $0x34] sm:$0xf]
    %v839 = vld [vmem:[#allocation14 + $0x38] sm:$0xf]
    %v840 = vld [vmem:[#allocation14 + $0x3c] sm:$0xf]
    %v841 = vld [vmem:[#allocation16] sm:$0x1]
    %v843 = vlaneseq
    %v844 = vshrl.u32 %v843, 7
    %v845 = vsub.s32 0, %v844
    %v846 = vrot.slane %v841, %v845
    %v864 = vunpack.c.l.b16 %v825
    %v865 = vunpack.c.l.b16 %v826
    %v866 = vunpack.c.l.b16 %v827
    %v867 = vunpack.c.l.b16 %v828
    %v868 = vunpack.c.l.b16 %v829
    %v869 = vunpack.c.l.b16 %v830
    %v870 = vunpack.c.l.b16 %v831
    %v871 = vunpack.c.l.b16 %v832
    %v872 = vunpack.c.l.b16 %v833
    %v873 = vunpack.c.l.b16 %v834
    %v874 = vunpack.c.l.b16 %v835
    %v875 = vunpack.c.l.b16 %v836
    %v876 = vunpack.c.l.b16 %v837
    %v877 = vunpack.c.l.b16 %v838
    %v878 = vunpack.c.l.b16 %v839
    %v879 = vunpack.c.l.b16 %v840
    %v880 = vpack.c.b16 %v865, %v864
    %v881 = vpack.c.b16 %v867, %v866
    %v882 = vpack.c.b16 %v869, %v868
    %v883 = vpack.c.b16 %v871, %v870
    %v884 = vpack.c.b16 %v873, %v872
    %v885 = vpack.c.b16 %v875, %v874
    %v886 = vpack.c.b16 %v877, %v876
    %v887 = vpack.c.b16 %v879, %v878
    %896 = vmatprep.subr.bf16.mxu0 0
    %897 = vmatpush1.bf16.msra.mxu0 %v880
    %898 = vmatprep.subr.bf16.mxu0 0
    %899 = vmatpush1.bf16.msra.mxu0 %v881
    %900 = vmatprep.subr.bf16.mxu0 0
    %901 = vmatpush1.bf16.msra.mxu0 %v882
    %902 = vmatprep.subr.bf16.mxu0 0
    %903 = vmatpush1.bf16.msra.mxu0 %v883
    %904 = vmatprep.subr.bf16.mxu0 0
    %905 = vmatpush1.bf16.msra.mxu0 %v884
    %906 = vmatprep.subr.bf16.mxu0 0
    %907 = vmatpush1.bf16.msra.mxu0 %v885
    %908 = vmatprep.subr.bf16.mxu0 0
    %909 = vmatpush1.bf16.msra.mxu0 %v886
    %910 = vmatprep.subr.bf16.mxu0 0
    %911 = vmatpush1.bf16.msra.mxu0 %v887
    %912 = vmatprep.subr.bf16.mxu0 0
    %913 = vmatpush1.bf16.msra.mxu0 0
    %914 = vmatprep.subr.bf16.mxu0 0
    %915 = vmatpush1.bf16.msra.mxu0 0
    %916 = vmatprep.subr.bf16.mxu0 0
    %917 = vmatpush1.bf16.msra.mxu0 0
    %918 = vmatprep.subr.bf16.mxu0 0
    %919 = vmatpush1.bf16.msra.mxu0 0
    %920 = vmatprep.subr.bf16.mxu0 0
    %921 = vmatpush1.bf16.msra.mxu0 0
    %922 = vmatprep.subr.bf16.mxu0 0
    %923 = vmatpush1.bf16.msra.mxu0 0
    %924 = vmatprep.subr.bf16.mxu0 0
    %925 = vmatpush1.bf16.msra.mxu0 0
    %926 = vmatprep.subr.bf16.mxu0 0
    %927 = vmatpush1.bf16.msra.mxu0 0
    %928 = vmatprep.mubr.bf16.mxu0 0
    %929 = vmatmul.mubr.bf16.gmra.mrb[0].mxu0 %v824
    %v930 = vpop.f32.mrb[0].mxu0
    %v931 = vadd.f32 %v846, %v930
    %v932 = vpop.f32.mrb[0].mxu0
    %v933 = vpop.f32.mrb[0].mxu0
    %v934 = vpop.f32.mrb[0].mxu0
    %935 = vdwg.mxu0
    %vm936 = vcmask 23552
    %937 = vst.msk [vmem:[#allocation17] sm:$0xff] %vm936, %v931
    // Predicated region
    $region74: #{xy_net_forward.1} parent=1 // pred_check
      _
    $region75: #{xy_net_forward.1} parent=1 // pred_check_branch
      %939 = sbr.rel (0) target = $region77
    $region76: #{xy_net_forward.1} parent=1 // pred_region
      %s941 = ssub.s32 128, 128
      %942 = vsyncadd [#allocation4], %s941
      %s944 = sshll.u32 [#allocation17], 4
      %s945 = int_to_ptr.vmem [resolvable:$true] %s944
      %947 = dma.vmem_to_hbm [thread:$0]  %s945, 128, %s9, [#allocation4]
    $region77: #{xy_net_forward.1} parent=1 // pred_fallthru
      _
    // Predicated region
    $region78: #{xy_net_forward.1} parent=1 // pred_check
      _
    $region79: #{xy_net_forward.1} parent=1 // pred_check_branch
      %949 = sbr.rel (0) target = $region81
    $region80: #{xy_net_forward.1} parent=1 // pred_region
      %950 = dma.done [#allocation4], 128
    $region81: #{xy_net_forward.1} parent=1 // pred_fallthru
      _
    %951 = vsyncpa [#allocation3], 1
    %952 = vsyncpa [#allocation6], 1
    %953 = vsyncpa [#allocation9], 1
    %954 = vsyncpa [#allocation12], 1
    %955 = vsyncpa [#allocation15], 1
    %956 = vsyncpa [#allocation4], 1

</llo_original>
